<compile_context>
chip_gen: v5e
topology: v5e:2x2
jax: 0.10.0
libtpu: 0.0.40
codegen_flags: <defaults>
</compile_context>

<pallas_src>
import math

import jax
import jax.numpy as jnp
from jax.experimental import pallas as pl
from jax.experimental.pallas import tpu as pltpu

HIDDEN_SIZES = [512, 256]
OUTPUT_SIZE = 3
OUT_PAD = 128  # lane-dense output width; real logits live in columns [:OUTPUT_SIZE]


def _round_up(x, m):
    return (x + m - 1) // m * m


def _qnet_kernel(x_ref, w1_ref, b1_ref, w2_ref, b2_ref, w3_ref, b3_ref, o_ref):
    # Layer 1: (tb, in_pad)bf16 @ (in_pad, 512)bf16 -> f32 acc, +bias f32, ReLU.
    h1 = jnp.dot(x_ref[...], w1_ref[...], preferred_element_type=jnp.float32)
    h1 = jnp.maximum(h1 + b1_ref[...], 0.0)
    # Layer 2: (tb, 512)bf16 @ (512, 256)bf16 -> f32 acc, +bias, ReLU.
    h2 = jnp.dot(h1.astype(jnp.bfloat16), w2_ref[...],
                 preferred_element_type=jnp.float32)
    h2 = jnp.maximum(h2 + b2_ref[...], 0.0)
    # Layer 3: (tb, 256)bf16 @ (256, 128)bf16 -> f32 acc, +bias (no activation).
    out = jnp.dot(h2.astype(jnp.bfloat16), w3_ref[...],
                  preferred_element_type=jnp.float32)
    o_ref[...] = (out + b3_ref[...]).astype(o_ref.dtype)


def advanced_qnet_forward(x, kparams, *, block_batch=256):
    """x: (B, input_size) float32. kparams: prepared (padded, bf16-weight) params.

    block_batch: batch tile size. 256 is a good default on v6e/v7x (MXU is
    2x256x256); 128 also works well on v5e. Small batches run as one tile.
    """
    B, in_features = x.shape
    in_pad = kparams["w1"].shape[0]

    # Batch tile: multiple of 16 (bf16 sublane packing); clamp for tiny batches.
    tb = min(block_batch, _round_up(max(B, 1), 16))
    b_pad = _round_up(B, tb)

    # Zero-pad batch rows + input features; cast activations to bf16 once here.
    xp = jnp.zeros((b_pad, in_pad), jnp.bfloat16)
    xp = xp.at[:B, :in_features].set(x.astype(jnp.bfloat16))

    grid = (b_pad // tb,)
    out_shape = jax.ShapeDtypeStruct((b_pad, OUT_PAD), jnp.float32)

    in_specs = [
        pl.BlockSpec((tb, in_pad), lambda i: (i, 0)),           # x: tiled on batch
        pl.BlockSpec(kparams["w1"].shape, lambda i: (0, 0)),    # weights/biases:
        pl.BlockSpec(kparams["b1"].shape, lambda i: (0, 0)),    # constant block index
        pl.BlockSpec(kparams["w2"].shape, lambda i: (0, 0)),    # -> VMEM-resident
        pl.BlockSpec(kparams["b2"].shape, lambda i: (0, 0)),    #    across grid steps
        pl.BlockSpec(kparams["w3"].shape, lambda i: (0, 0)),
        pl.BlockSpec(kparams["b3"].shape, lambda i: (0, 0)),
    ]
    out_specs = pl.BlockSpec((tb, OUT_PAD), lambda i: (i, 0))

    out = pl.pallas_call(
        _qnet_kernel,
        out_shape=out_shape,
        grid=grid,
        in_specs=in_specs,
        out_specs=out_specs,
        compiler_params=pltpu.CompilerParams(
            dimension_semantics=("parallel",)),  # megacore split on v7x
    )(xp, kparams["w1"], kparams["b1"], kparams["w2"], kparams["b2"],
      kparams["w3"], kparams["b3"])

    return out[:B, :OUTPUT_SIZE]


def init_params(key, input_size, hidden_sizes, output_size):
    """PyTorch nn.Linear-style init (uniform(+-1/sqrt(fan_in))), stored (in, out), f32."""
    params = {}
    sizes = [input_size] + list(hidden_sizes) + [output_size]
    for i, (fan_in, fan_out) in enumerate(zip(sizes[:-1], sizes[1:]), start=1):
        key, kw, kb = jax.random.split(key, 3)
        bound = 1.0 / math.sqrt(fan_in)
        params[f"w{i}"] = jax.random.uniform(
            kw, (fan_in, fan_out), jnp.float32, minval=-bound, maxval=bound)
        params[f"b{i}"] = jax.random.uniform(
            kb, (1, fan_out), jnp.float32, minval=-bound, maxval=bound)
    return params


def prepare_params(raw, input_size):
    """Pad + cast once at setup: bf16 weights (input size zero-padded to a multiple
    of 8, output zero-padded to 128 columns); biases kept f32 (b3 zero-padded)."""
    in_pad = _round_up(input_size, 8)
    w1 = jnp.zeros((in_pad, HIDDEN_SIZES[0]), jnp.bfloat16)
    w1 = w1.at[:input_size, :].set(raw["w1"].astype(jnp.bfloat16))
    w2 = raw["w2"].astype(jnp.bfloat16)
    w3 = jnp.zeros((HIDDEN_SIZES[1], OUT_PAD), jnp.bfloat16)
    w3 = w3.at[:, :OUTPUT_SIZE].set(raw["w3"].astype(jnp.bfloat16))
    b3 = jnp.zeros((1, OUT_PAD), jnp.float32).at[:, :OUTPUT_SIZE].set(raw["b3"])
    return {"w1": w1, "b1": raw["b1"], "w2": w2, "b2": raw["b2"],
            "w3": w3, "b3": b3}


def reference_forward(x, kparams, input_size):
    """Pure-JAX reference following the exact same dtype flow as the kernel."""
    in_pad = kparams["w1"].shape[0]
    xp = jnp.zeros((x.shape[0], in_pad), jnp.bfloat16)
    xp = xp.at[:, :input_size].set(x.astype(jnp.bfloat16))
    h1 = jnp.maximum(
        jnp.dot(xp, kparams["w1"], preferred_element_type=jnp.float32)
        + kparams["b1"], 0.0)
    h2 = jnp.maximum(
        jnp.dot(h1.astype(jnp.bfloat16), kparams["w2"],
                preferred_element_type=jnp.float32) + kparams["b2"], 0.0)
    out = jnp.dot(h2.astype(jnp.bfloat16), kparams["w3"],
                  preferred_element_type=jnp.float32) + kparams["b3"]
    return out[:, :OUTPUT_SIZE]


if __name__ == "__main__":
    INPUT_SIZE = 11   # snake game state vector
    BATCH = 2

    key = jax.random.PRNGKey(0)
    key, kx = jax.random.split(key)
    x = jax.random.normal(kx, (BATCH, INPUT_SIZE), jnp.float32)

    raw_params = init_params(key, INPUT_SIZE, HIDDEN_SIZES, OUTPUT_SIZE)
    kparams = prepare_params(raw_params, INPUT_SIZE)

    out = advanced_qnet_forward(x, kparams)
    out = jax.block_until_ready(out)

    ref = reference_forward(x, kparams, INPUT_SIZE)
    assert out.shape == (BATCH, OUTPUT_SIZE)
    assert jnp.allclose(out, ref, atol=1e-2, rtol=1e-2), "mismatch vs reference"

    print("KERNEL_OK")
</pallas_src>

<mosaic_0001>
module attributes {stable_mosaic.version = 11 : i64} {
  func.func @_qnet_kernel(%arg0: i32, %arg1: memref<16x16xbf16, #tpu.memory_space<vmem>>, %arg2: memref<16x512xbf16, #tpu.memory_space<vmem>>, %arg3: memref<1x512xf32, #tpu.memory_space<vmem>>, %arg4: memref<512x256xbf16, #tpu.memory_space<vmem>>, %arg5: memref<1x256xf32, #tpu.memory_space<vmem>>, %arg6: memref<256x128xbf16, #tpu.memory_space<vmem>>, %arg7: memref<1x128xf32, #tpu.memory_space<vmem>>, %arg8: memref<16x128xf32, #tpu.memory_space<vmem>>) attributes {dimension_semantics = [#tpu.dimension_semantics<parallel>], iteration_bounds = array<i64: 1>, scalar_prefetch = 0 : i64, scratch_operands = 0 : i64, tpu.core_type = #tpu.core_type<tc>, window_params = [{transform_indices = @transform_0, window_bounds = array<i64: 16, 16>}, {pipeline_mode = #tpu.pipeline_mode<synchronous>, transform_indices = @transform_1, window_bounds = array<i64: 16, 512>}, {pipeline_mode = #tpu.pipeline_mode<synchronous>, transform_indices = @transform_2, window_bounds = array<i64: 1, 512>}, {pipeline_mode = #tpu.pipeline_mode<synchronous>, transform_indices = @transform_3, window_bounds = array<i64: 512, 256>}, {pipeline_mode = #tpu.pipeline_mode<synchronous>, transform_indices = @transform_4, window_bounds = array<i64: 1, 256>}, {pipeline_mode = #tpu.pipeline_mode<synchronous>, transform_indices = @transform_5, window_bounds = array<i64: 256, 128>}, {pipeline_mode = #tpu.pipeline_mode<synchronous>, transform_indices = @transform_6, window_bounds = array<i64: 1, 128>}, {transform_indices = @transform_7, window_bounds = array<i64: 16, 128>}]} {
    %c0 = arith.constant 0 : index
    %c0_0 = arith.constant 0 : index
    %0 = vector.load %arg1[%c0, %c0_0] : memref<16x16xbf16, #tpu.memory_space<vmem>>, vector<16x16xbf16>
    %c0_1 = arith.constant 0 : index
    %c0_2 = arith.constant 0 : index
    %1 = vector.load %arg2[%c0_1, %c0_2] : memref<16x512xbf16, #tpu.memory_space<vmem>>, vector<16x512xbf16>
    %cst = arith.constant dense<0.000000e+00> : vector<16x512xf32>
    %2 = tpu.matmul %0, %1, %cst {dimension_numbers = #tpu.dot_dimension_numbers<[1], [0], [0], [1], [0, 0, 1, 1], [], []>} : vector<16x16xbf16>, vector<16x512xbf16>, vector<16x512xf32> -> vector<16x512xf32>
    %c0_3 = arith.constant 0 : index
    %c0_4 = arith.constant 0 : index
    %3 = vector.load %arg3[%c0_3, %c0_4] : memref<1x512xf32, #tpu.memory_space<vmem>>, vector<1x512xf32>
    %4 = vector.broadcast %3 : vector<1x512xf32> to vector<16x512xf32>
    %5 = arith.addf %2, %4 : vector<16x512xf32>
    %cst_5 = arith.constant 0.000000e+00 : f32
    %6 = vector.broadcast %cst_5 : f32 to vector<16x512xf32>
    %7 = arith.maximumf %5, %6 : vector<16x512xf32>
    %8 = arith.truncf %7 : vector<16x512xf32> to vector<16x512xbf16>
    %c0_6 = arith.constant 0 : index
    %c0_7 = arith.constant 0 : index
    %9 = vector.load %arg4[%c0_6, %c0_7] : memref<512x256xbf16, #tpu.memory_space<vmem>>, vector<512x256xbf16>
    %cst_8 = arith.constant dense<0.000000e+00> : vector<16x256xf32>
    %10 = tpu.matmul %8, %9, %cst_8 {dimension_numbers = #tpu.dot_dimension_numbers<[1], [0], [0], [1], [0, 0, 1, 1], [], []>} : vector<16x512xbf16>, vector<512x256xbf16>, vector<16x256xf32> -> vector<16x256xf32>
    %c0_9 = arith.constant 0 : index
    %c0_10 = arith.constant 0 : index
    %11 = vector.load %arg5[%c0_9, %c0_10] : memref<1x256xf32, #tpu.memory_space<vmem>>, vector<1x256xf32>
    %12 = vector.broadcast %11 : vector<1x256xf32> to vector<16x256xf32>
    %13 = arith.addf %10, %12 : vector<16x256xf32>
    %cst_11 = arith.constant 0.000000e+00 : f32
    %14 = vector.broadcast %cst_11 : f32 to vector<16x256xf32>
    %15 = arith.maximumf %13, %14 : vector<16x256xf32>
    %16 = arith.truncf %15 : vector<16x256xf32> to vector<16x256xbf16>
    %c0_12 = arith.constant 0 : index
    %c0_13 = arith.constant 0 : index
    %17 = vector.load %arg6[%c0_12, %c0_13] : memref<256x128xbf16, #tpu.memory_space<vmem>>, vector<256x128xbf16>
    %cst_14 = arith.constant dense<0.000000e+00> : vector<16x128xf32>
    %18 = tpu.matmul %16, %17, %cst_14 {dimension_numbers = #tpu.dot_dimension_numbers<[1], [0], [0], [1], [0, 0, 1, 1], [], []>} : vector<16x256xbf16>, vector<256x128xbf16>, vector<16x128xf32> -> vector<16x128xf32>
    %c0_15 = arith.constant 0 : index
    %c0_16 = arith.constant 0 : index
    %19 = vector.load %arg7[%c0_15, %c0_16] : memref<1x128xf32, #tpu.memory_space<vmem>>, vector<1x128xf32>
    %20 = vector.broadcast %19 : vector<1x128xf32> to vector<16x128xf32>
    %21 = arith.addf %18, %20 : vector<16x128xf32>
    %c0_17 = arith.constant 0 : index
    %c0_18 = arith.constant 0 : index
    %22 = vector.load %arg8[%c0_17, %c0_18] : memref<16x128xf32, #tpu.memory_space<vmem>>, vector<16x128xf32>
    tpu.vector_store %arg8[%c0_17, %c0_18], %21 {strides = array<i32>} : memref<16x128xf32, #tpu.memory_space<vmem>>, vector<16x128xf32>,
    return
  }
  func.func @transform_0(%arg0: i32) -> (i32, i32) {
    %c0_i32 = arith.constant 0 : i32
    %c0_i32_0 = arith.constant 0 : i32
    return %arg0, %c0_i32 : i32, i32
  }
  func.func @transform_1(%arg0: i32) -> (i32, i32) {
    %c0_i32 = arith.constant 0 : i32
    %c0_i32_0 = arith.constant 0 : i32
    %c0_i32_1 = arith.constant 0 : i32
    return %c0_i32, %c0_i32_0 : i32, i32
  }
  func.func @transform_2(%arg0: i32) -> (i32, i32) {
    %c0_i32 = arith.constant 0 : i32
    %c0_i32_0 = arith.constant 0 : i32
    %c0_i32_1 = arith.constant 0 : i32
    return %c0_i32, %c0_i32_0 : i32, i32
  }
  func.func @transform_3(%arg0: i32) -> (i32, i32) {
    %c0_i32 = arith.constant 0 : i32
    %c0_i32_0 = arith.constant 0 : i32
    %c0_i32_1 = arith.constant 0 : i32
    return %c0_i32, %c0_i32_0 : i32, i32
  }
  func.func @transform_4(%arg0: i32) -> (i32, i32) {
    %c0_i32 = arith.constant 0 : i32
    %c0_i32_0 = arith.constant 0 : i32
    %c0_i32_1 = arith.constant 0 : i32
    return %c0_i32, %c0_i32_0 : i32, i32
  }
  func.func @transform_5(%arg0: i32) -> (i32, i32) {
    %c0_i32 = arith.constant 0 : i32
    %c0_i32_0 = arith.constant 0 : i32
    %c0_i32_1 = arith.constant 0 : i32
    return %c0_i32, %c0_i32_0 : i32, i32
  }
  func.func @transform_6(%arg0: i32) -> (i32, i32) {
    %c0_i32 = arith.constant 0 : i32
    %c0_i32_0 = arith.constant 0 : i32
    %c0_i32_1 = arith.constant 0 : i32
    return %c0_i32, %c0_i32_0 : i32, i32
  }
  func.func @transform_7(%arg0: i32) -> (i32, i32) {
    %c0_i32 = arith.constant 0 : i32
    %c0_i32_0 = arith.constant 0 : i32
    return %arg0, %c0_i32 : i32, i32
  }
}

</mosaic_0001>

<llo_original>
// kernel: tpu_custom_call.1
$region0: #{tpu_custom_call.1}
  #allocation0 [shape = 'u32[]', space=smem, size = 0x4, offset = 0x4, fixed_abs, tag = 'smem constant byte address 0x4 - core index']
  #allocation1 [shape = 'u32[72,128]{1,0:T(1,128)}', space=vmem, size = 0x9000, scoped, tag = 'internal scratch']
  %s0 = inlined_call_operand.hbm [shape: bf16[16,16], index: 0, kind: input, shape index: {}]
  %s1 = inlined_call_operand.hbm [shape: bf16[16,512], index: 1, kind: input, shape index: {}]
  %s2 = inlined_call_operand.hbm [shape: f32[1,512], index: 2, kind: input, shape index: {}]
  %s3 = inlined_call_operand.hbm [shape: bf16[512,256], index: 3, kind: input, shape index: {}]
  %s4 = inlined_call_operand.vmem [shape: f32[1,256], index: 4, kind: input, shape index: {}]
  %s5 = inlined_call_operand.hbm [shape: bf16[256,128], index: 5, kind: input, shape index: {}]
  %s6 = inlined_call_operand.vmem [shape: f32[1,128], index: 6, kind: input, shape index: {}]
  %s7 = inlined_call_operand.hbm [shape: f32[16,128], index: 7, kind: output, shape index: {}]
  %s8 = sld [smem:[#allocation0]]
  $region58: #{tpu_custom_call.1} parent=0
    _
  %s10 = ssub.s32 1, %s8
  %s11 = scalar_select 0, %s10, %s8
  $region1: #{tpu_custom_call.1} parent=0
    #allocation2 [shape = 'u8[4096]{0}', space=vmem, size = 0x1000, scoped, tag = 'input window, operand 0, single buffered']
    #allocation3 [shape = 's32[1]{0}', space=sflag, size = 0x4, scoped, tag = 'scoped memory for tpu_custom_call.1']
    #allocation4 [shape = 's32[1]{0}', space=sflag, size = 0x4, scoped, tag = 'scoped memory for tpu_custom_call.1']
    #allocation5 [shape = 'u8[16384]{0}', space=vmem, size = 0x4000, scoped, tag = 'input window, operand 1, single buffered']
    #allocation6 [shape = 's32[1]{0}', space=sflag, size = 0x4, scoped, tag = 'scoped memory for tpu_custom_call.1']
    #allocation7 [shape = 'u8[2048]{0}', space=vmem, size = 0x800, scoped, tag = 'input window, operand 2, single buffered']
    #allocation8 [shape = 'u8[262144]{0}', space=vmem, size = 0x40000, scoped, tag = 'input window, operand 3, single buffered']
    #allocation9 [shape = 's32[1]{0}', space=sflag, size = 0x4, scoped, tag = 'scoped memory for tpu_custom_call.1']
    #allocation10 [shape = 'u8[65536]{0}', space=vmem, size = 0x10000, scoped, tag = 'input window, operand 5, single buffered']
    #allocation11 [shape = 'u8[8192]{0}', space=vmem, size = 0x2000, scoped, tag = 'output window, operand 0, single buffered']
    %12 = vsyncpa [#allocation3], 0
    %13 = vsyncpa [#allocation6], 0
    %14 = vsyncpa [#allocation9], 0
    %15 = vsyncpa [#allocation4], 0
    // Predicated region
    $region2: #{tpu_custom_call.1} parent=1 // pred_check
      _
    $region3: #{tpu_custom_call.1} parent=1 // pred_check_branch
      %17 = sbr.rel (0) target = $region5
    $region4: #{tpu_custom_call.1} parent=1 // pred_region
      %19 = vsyncadd [#allocation3], 0
      %s20 = sshll.u32 %s0, 4
      %s21 = int_to_ptr.hbm [resolvable:$true] %s20
      %s22 = sshll.u32 [#allocation2], 4
      %s23 = int_to_ptr.vmem [resolvable:$true] %s22
      %28 = dma.hbm_to_vmem [thread:$0]  %s21, 128, %s23, [#allocation3], 64, 64, 4
    $region5: #{tpu_custom_call.1} parent=1 // pred_fallthru
      _
    // Predicated region
    $region6: #{tpu_custom_call.1} parent=1 // pred_check
      _
    $region7: #{tpu_custom_call.1} parent=1 // pred_check_branch
      %30 = sbr.rel (0) target = $region9
    $region8: #{tpu_custom_call.1} parent=1 // pred_region
      %32 = vsyncadd [#allocation6], 0
      %s33 = sshll.u32 %s1, 4
      %s34 = int_to_ptr.hbm [resolvable:$true] %s33
      %s35 = sshll.u32 [#allocation5], 4
      %s36 = int_to_ptr.vmem [resolvable:$true] %s35
      %41 = dma.hbm_to_vmem [thread:$0]  %s34, 512, %s36, [#allocation6], 256, 256, 16
    $region9: #{tpu_custom_call.1} parent=1 // pred_fallthru
      _
    // Predicated region
    $region10: #{tpu_custom_call.1} parent=1 // pred_check
      _
    $region11: #{tpu_custom_call.1} parent=1 // pred_check_branch
      %43 = sbr.rel (0) target = $region13
    $region12: #{tpu_custom_call.1} parent=1 // pred_region
      %45 = vsyncadd [#allocation6], 0
      %s47 = sshll.u32 %s2, 4
      %s48 = int_to_ptr.hbm [resolvable:$true] %s47
      %s49 = sshll.u32 [#allocation7], 4
      %s50 = int_to_ptr.vmem [resolvable:$true] %s49
      %52 = dma.hbm_to_vmem [thread:$0]  %s48, 64, %s50, [#allocation6]
    $region13: #{tpu_custom_call.1} parent=1 // pred_fallthru
      _
    // Predicated region
    $region14: #{tpu_custom_call.1} parent=1 // pred_check
      _
    $region15: #{tpu_custom_call.1} parent=1 // pred_check_branch
      %54 = sbr.rel (0) target = $region17
    $region16: #{tpu_custom_call.1} parent=1 // pred_region
      %56 = vsyncadd [#allocation9], 0
      %s57 = sshll.u32 %s3, 4
      %s58 = int_to_ptr.hbm [resolvable:$true] %s57
      %s59 = sshll.u32 [#allocation8], 4
      %s60 = int_to_ptr.vmem [resolvable:$true] %s59
      %65 = dma.hbm_to_vmem [thread:$0]  %s58, 8192, %s60, [#allocation9], 128, 128, 8
    $region17: #{tpu_custom_call.1} parent=1 // pred_fallthru
      _
    // Predicated region
    $region18: #{tpu_custom_call.1} parent=1 // pred_check
      _
    $region19: #{tpu_custom_call.1} parent=1 // pred_check_branch
      %67 = sbr.rel (0) target = $region21
    $region20: #{tpu_custom_call.1} parent=1 // pred_region
      _
    $region21: #{tpu_custom_call.1} parent=1 // pred_fallthru
      _
    // Predicated region
    $region22: #{tpu_custom_call.1} parent=1 // pred_check
      _
    $region23: #{tpu_custom_call.1} parent=1 // pred_check_branch
      %69 = sbr.rel (0) target = $region25
    $region24: #{tpu_custom_call.1} parent=1 // pred_region
      %71 = vsyncadd [#allocation9], 0
      %s72 = sshll.u32 %s5, 4
      %s73 = int_to_ptr.hbm [resolvable:$true] %s72
      %s74 = sshll.u32 [#allocation10], 4
      %s75 = int_to_ptr.vmem [resolvable:$true] %s74
      %80 = dma.hbm_to_vmem [thread:$0]  %s73, 2048, %s75, [#allocation9], 64, 64, 4
    $region25: #{tpu_custom_call.1} parent=1 // pred_fallthru
      _
    // Predicated region
    $region26: #{tpu_custom_call.1} parent=1 // pred_check
      _
    $region27: #{tpu_custom_call.1} parent=1 // pred_check_branch
      %82 = sbr.rel (0) target = $region29
    $region28: #{tpu_custom_call.1} parent=1 // pred_region
      _
    $region29: #{tpu_custom_call.1} parent=1 // pred_fallthru
      _
    // Predicated region
    $region30: #{tpu_custom_call.1} parent=1 // pred_check
      _
    $region31: #{tpu_custom_call.1} parent=1 // pred_check_branch
      %84 = sbr.rel (0) target = $region33
    $region32: #{tpu_custom_call.1} parent=1 // pred_region
      %86 = dma.done [#allocation3], 128
    $region33: #{tpu_custom_call.1} parent=1 // pred_fallthru
      _
    // Predicated region
    $region34: #{tpu_custom_call.1} parent=1 // pred_check
      _
    $region35: #{tpu_custom_call.1} parent=1 // pred_check_branch
      %88 = sbr.rel (0) target = $region37
    $region36: #{tpu_custom_call.1} parent=1 // pred_region
      %90 = dma.done [#allocation6], 512
    $region37: #{tpu_custom_call.1} parent=1 // pred_fallthru
      _
    // Predicated region
    $region38: #{tpu_custom_call.1} parent=1 // pred_check
      _
    $region39: #{tpu_custom_call.1} parent=1 // pred_check_branch
      %92 = sbr.rel (0) target = $region41
    $region40: #{tpu_custom_call.1} parent=1 // pred_region
      %94 = dma.done [#allocation6], 64
    $region41: #{tpu_custom_call.1} parent=1 // pred_fallthru
      _
    // Predicated region
    $region42: #{tpu_custom_call.1} parent=1 // pred_check
      _
    $region43: #{tpu_custom_call.1} parent=1 // pred_check_branch
      %96 = sbr.rel (0) target = $region45
    $region44: #{tpu_custom_call.1} parent=1 // pred_region
      %98 = dma.done [#allocation9], 8192
    $region45: #{tpu_custom_call.1} parent=1 // pred_fallthru
      _
    // Predicated region
    $region46: #{tpu_custom_call.1} parent=1 // pred_check
      _
    $region47: #{tpu_custom_call.1} parent=1 // pred_check_branch
      %100 = sbr.rel (0) target = $region49
    $region48: #{tpu_custom_call.1} parent=1 // pred_region
      %102 = dma.done [#allocation9], 2048
    $region49: #{tpu_custom_call.1} parent=1 // pred_fallthru
      _
    %v104 = vld [vmem:[#allocation2] sm:$0xf]
    %v105 = vld [vmem:[#allocation2 + $0x4] sm:$0xf]
    %v106 = vld [vmem:[#allocation5] sm:$0xff]
    %v107 = vld [vmem:[#allocation5 + $0x8] sm:$0xff]
    %v108 = vld [vmem:[#allocation5 + $0x10] sm:$0xff]
    %v109 = vld [vmem:[#allocation5 + $0x18] sm:$0xff]
    %v110 = vld [vmem:[#allocation7] sm:$0xf]
    %v112 = vperm.slane %v110, 0
    %v113 = vperm.slane %v110, 1
    %v114 = vperm.slane %v110, 2
    %v115 = vperm.slane %v110, 3
    %v122 = vunpack.c.l.b16 %v104
    %v123 = vunpack.c.l.b16 %v105
    %v124 = vpack.c.b16 %v123, %v122
    %v129 = vunpack.c.l.b16 %v106
    %v130 = vunpack.c.h.b16 %v106
    %v131 = vunpack.c.l.b16 %v107
    %v132 = vunpack.c.h.b16 %v107
    %v133 = vunpack.c.l.b16 %v108
    %v134 = vunpack.c.h.b16 %v108
    %v135 = vunpack.c.l.b16 %v109
    %v136 = vunpack.c.h.b16 %v109
    %v137 = vpack.c.b16 %v133, %v129
    %v138 = vpack.c.b16 %v134, %v130
    %v139 = vpack.c.b16 %v135, %v131
    %v140 = vpack.c.b16 %v136, %v132
    %vm145 = vcmask 130048
    %v147 = vsel %vm145, %v124, 0
    %149 = vmatpush.bf16.msra.mxu0 0
    %150 = vmatpush.bf16.msra.mxu0 0
    %151 = vmatpush.bf16.msra.mxu0 0
    %152 = vmatpush.bf16.msra.mxu0 0
    %153 = vmatpush.bf16.msra.mxu0 0
    %154 = vmatpush.bf16.msra.mxu0 0
    %155 = vmatpush.bf16.msra.mxu0 0
    %156 = vmatpush.bf16.msra.mxu0 %v137
    %157 = vmatmul.bf16.gmra.mxu0 %v147
    %v158 = vpop.f32.mrf.mxu0
    %v159 = vadd.f32 %v112, %v158
    %v160 = vpop.f32.mrf.mxu0
    %v161 = vadd.f32 %v112, %v160
    %162 = vdwg.mxu0
    %163 = vmatpush.bf16.msra.mxu0 0
    %164 = vmatpush.bf16.msra.mxu0 0
    %165 = vmatpush.bf16.msra.mxu0 0
    %166 = vmatpush.bf16.msra.mxu0 0
    %167 = vmatpush.bf16.msra.mxu0 0
    %168 = vmatpush.bf16.msra.mxu0 0
    %169 = vmatpush.bf16.msra.mxu0 0
    %170 = vmatpush.bf16.msra.mxu0 %v138
    %171 = vmatmul.bf16.gmra.mxu0 %v147
    %v172 = vpop.f32.mrf.mxu0
    %v173 = vadd.f32 %v113, %v172
    %v174 = vpop.f32.mrf.mxu0
    %v175 = vadd.f32 %v113, %v174
    %176 = vdwg.mxu0
    %177 = vmatpush.bf16.msra.mxu0 0
    %178 = vmatpush.bf16.msra.mxu0 0
    %179 = vmatpush.bf16.msra.mxu0 0
    %180 = vmatpush.bf16.msra.mxu0 0
    %181 = vmatpush.bf16.msra.mxu0 0
    %182 = vmatpush.bf16.msra.mxu0 0
    %183 = vmatpush.bf16.msra.mxu0 0
    %184 = vmatpush.bf16.msra.mxu0 %v139
    %185 = vmatmul.bf16.gmra.mxu0 %v147
    %v186 = vpop.f32.mrf.mxu0
    %v187 = vadd.f32 %v114, %v186
    %v188 = vpop.f32.mrf.mxu0
    %v189 = vadd.f32 %v114, %v188
    %190 = vdwg.mxu0
    %191 = vmatpush.bf16.msra.mxu0 0
    %192 = vmatpush.bf16.msra.mxu0 0
    %193 = vmatpush.bf16.msra.mxu0 0
    %194 = vmatpush.bf16.msra.mxu0 0
    %195 = vmatpush.bf16.msra.mxu0 0
    %196 = vmatpush.bf16.msra.mxu0 0
    %197 = vmatpush.bf16.msra.mxu0 0
    %198 = vmatpush.bf16.msra.mxu0 %v140
    %199 = vmatmul.bf16.gmra.mxu0 %v147
    %v200 = vpop.f32.mrf.mxu0
    %v201 = vadd.f32 %v115, %v200
    %v202 = vpop.f32.mrf.mxu0
    %v203 = vadd.f32 %v115, %v202
    %204 = vdwg.mxu0
    %v205 = vmax.f32 %v159, 0.0
    %v206 = vmax.f32 %v173, 0.0
    %v207 = vmax.f32 %v187, 0.0
    %v208 = vmax.f32 %v201, 0.0
    %v209 = vmax.f32 %v161, 0.0
    %v210 = vmax.f32 %v175, 0.0
    %v211 = vmax.f32 %v189, 0.0
    %v212 = vmax.f32 %v203, 0.0
    %v213 = vpack.c.bf16 %v209, %v205
    %v214 = vpack.c.bf16 %v210, %v206
    %v215 = vpack.c.bf16 %v211, %v207
    %v216 = vpack.c.bf16 %v212, %v208
    %v217 = vld [vmem:[#allocation8] sm:$0xff]
    %v218 = vld [vmem:[#allocation8 + $0x8] sm:$0xff]
    %v219 = vld [vmem:[#allocation8 + $0x10] sm:$0xff]
    %v220 = vld [vmem:[#allocation8 + $0x18] sm:$0xff]
    %v221 = vld [vmem:[#allocation8 + $0x20] sm:$0xff]
    %v222 = vld [vmem:[#allocation8 + $0x28] sm:$0xff]
    %v223 = vld [vmem:[#allocation8 + $0x30] sm:$0xff]
    %v224 = vld [vmem:[#allocation8 + $0x38] sm:$0xff]
    %v225 = vld [vmem:[#allocation8 + $0x40] sm:$0xff]
    %v226 = vld [vmem:[#allocation8 + $0x48] sm:$0xff]
    %v227 = vld [vmem:[#allocation8 + $0x50] sm:$0xff]
    %v228 = vld [vmem:[#allocation8 + $0x58] sm:$0xff]
    %v229 = vld [vmem:[#allocation8 + $0x60] sm:$0xff]
    %v230 = vld [vmem:[#allocation8 + $0x68] sm:$0xff]
    %v231 = vld [vmem:[#allocation8 + $0x70] sm:$0xff]
    %v232 = vld [vmem:[#allocation8 + $0x78] sm:$0xff]
    %v233 = vld [vmem:[#allocation8 + $0x80] sm:$0xff]
    %v234 = vld [vmem:[#allocation8 + $0x88] sm:$0xff]
    %v235 = vld [vmem:[#allocation8 + $0x90] sm:$0xff]
    %v236 = vld [vmem:[#allocation8 + $0x98] sm:$0xff]
    %v237 = vld [vmem:[#allocation8 + $0xa0] sm:$0xff]
    %v238 = vld [vmem:[#allocation8 + $0xa8] sm:$0xff]
    %v239 = vld [vmem:[#allocation8 + $0xb0] sm:$0xff]
    %v240 = vld [vmem:[#allocation8 + $0xb8] sm:$0xff]
    %v241 = vld [vmem:[#allocation8 + $0xc0] sm:$0xff]
    %v242 = vld [vmem:[#allocation8 + $0xc8] sm:$0xff]
    %v243 = vld [vmem:[#allocation8 + $0xd0] sm:$0xff]
    %v244 = vld [vmem:[#allocation8 + $0xd8] sm:$0xff]
    %v245 = vld [vmem:[#allocation8 + $0xe0] sm:$0xff]
    %v246 = vld [vmem:[#allocation8 + $0xe8] sm:$0xff]
    %v247 = vld [vmem:[#allocation8 + $0xf0] sm:$0xff]
    %v248 = vld [vmem:[#allocation8 + $0xf8] sm:$0xff]
    %v249 = vld [vmem:[#allocation8 + $0x100] sm:$0xff]
    %v250 = vld [vmem:[#allocation8 + $0x108] sm:$0xff]
    %v251 = vld [vmem:[#allocation8 + $0x110] sm:$0xff]
    %v252 = vld [vmem:[#allocation8 + $0x118] sm:$0xff]
    %v253 = vld [vmem:[#allocation8 + $0x120] sm:$0xff]
    %v254 = vld [vmem:[#allocation8 + $0x128] sm:$0xff]
    %v255 = vld [vmem:[#allocation8 + $0x130] sm:$0xff]
    %v256 = vld [vmem:[#allocation8 + $0x138] sm:$0xff]
    %v257 = vld [vmem:[#allocation8 + $0x140] sm:$0xff]
    %v258 = vld [vmem:[#allocation8 + $0x148] sm:$0xff]
    %v259 = vld [vmem:[#allocation8 + $0x150] sm:$0xff]
    %v260 = vld [vmem:[#allocation8 + $0x158] sm:$0xff]
    %v261 = vld [vmem:[#allocation8 + $0x160] sm:$0xff]
    %v262 = vld [vmem:[#allocation8 + $0x168] sm:$0xff]
    %v263 = vld [vmem:[#allocation8 + $0x170] sm:$0xff]
    %v264 = vld [vmem:[#allocation8 + $0x178] sm:$0xff]
    %v265 = vld [vmem:[#allocation8 + $0x180] sm:$0xff]
    %v266 = vld [vmem:[#allocation8 + $0x188] sm:$0xff]
    %v267 = vld [vmem:[#allocation8 + $0x190] sm:$0xff]
    %v268 = vld [vmem:[#allocation8 + $0x198] sm:$0xff]
    %v269 = vld [vmem:[#allocation8 + $0x1a0] sm:$0xff]
    %v270 = vld [vmem:[#allocation8 + $0x1a8] sm:$0xff]
    %v271 = vld [vmem:[#allocation8 + $0x1b0] sm:$0xff]
    %v272 = vld [vmem:[#allocation8 + $0x1b8] sm:$0xff]
    %v273 = vld [vmem:[#allocation8 + $0x1c0] sm:$0xff]
    %v274 = vld [vmem:[#allocation8 + $0x1c8] sm:$0xff]
    %v275 = vld [vmem:[#allocation8 + $0x1d0] sm:$0xff]
    %v276 = vld [vmem:[#allocation8 + $0x1d8] sm:$0xff]
    %v277 = vld [vmem:[#allocation8 + $0x1e0] sm:$0xff]
    %v278 = vld [vmem:[#allocation8 + $0x1e8] sm:$0xff]
    %v279 = vld [vmem:[#allocation8 + $0x1f0] sm:$0xff]
    %v280 = vld [vmem:[#allocation8 + $0x1f8] sm:$0xff]
    %v281 = vld [vmem:[%s4] sm:$0x3]
    %v283 = vperm.slane %v281, 0
    %v284 = vperm.slane %v281, 1
    %v351 = vunpack.c.l.b16 %v217
    %v352 = vunpack.c.h.b16 %v217
    %v353 = vunpack.c.l.b16 %v218
    %v354 = vunpack.c.h.b16 %v218
    %v355 = vunpack.c.l.b16 %v219
    %v356 = vunpack.c.h.b16 %v219
    %v357 = vunpack.c.l.b16 %v220
    %v358 = vunpack.c.h.b16 %v220
    %v359 = vunpack.c.l.b16 %v221
    %v360 = vunpack.c.h.b16 %v221
    %v361 = vunpack.c.l.b16 %v222
    %v362 = vunpack.c.h.b16 %v222
    %v363 = vunpack.c.l.b16 %v223
    %v364 = vunpack.c.h.b16 %v223
    %v365 = vunpack.c.l.b16 %v224
    %v366 = vunpack.c.h.b16 %v224
    %v367 = vunpack.c.l.b16 %v225
    %v368 = vunpack.c.h.b16 %v225
    %v369 = vunpack.c.l.b16 %v226
    %v370 = vunpack.c.h.b16 %v226
    %v371 = vunpack.c.l.b16 %v227
    %v372 = vunpack.c.h.b16 %v227
    %v373 = vunpack.c.l.b16 %v228
    %v374 = vunpack.c.h.b16 %v228
    %v375 = vunpack.c.l.b16 %v229
    %v376 = vunpack.c.h.b16 %v229
    %v377 = vunpack.c.l.b16 %v230
    %v378 = vunpack.c.h.b16 %v230
    %v379 = vunpack.c.l.b16 %v231
    %v380 = vunpack.c.h.b16 %v231
    %v381 = vunpack.c.l.b16 %v232
    %v382 = vunpack.c.h.b16 %v232
    %v383 = vunpack.c.l.b16 %v233
    %v384 = vunpack.c.h.b16 %v233
    %v385 = vunpack.c.l.b16 %v234
    %v386 = vunpack.c.h.b16 %v234
    %v387 = vunpack.c.l.b16 %v235
    %v388 = vunpack.c.h.b16 %v235
    %v389 = vunpack.c.l.b16 %v236
    %v390 = vunpack.c.h.b16 %v236
    %v391 = vunpack.c.l.b16 %v237
    %v392 = vunpack.c.h.b16 %v237
    %v393 = vunpack.c.l.b16 %v238
    %v394 = vunpack.c.h.b16 %v238
    %v395 = vunpack.c.l.b16 %v239
    %v396 = vunpack.c.h.b16 %v239
    %v397 = vunpack.c.l.b16 %v240
    %v398 = vunpack.c.h.b16 %v240
    %v399 = vunpack.c.l.b16 %v241
    %v400 = vunpack.c.h.b16 %v241
    %v401 = vunpack.c.l.b16 %v242
    %v402 = vunpack.c.h.b16 %v242
    %v403 = vunpack.c.l.b16 %v243
    %v404 = vunpack.c.h.b16 %v243
    %v405 = vunpack.c.l.b16 %v244
    %v406 = vunpack.c.h.b16 %v244
    %v407 = vunpack.c.l.b16 %v245
    %v408 = vunpack.c.h.b16 %v245
    %v409 = vunpack.c.l.b16 %v246
    %v410 = vunpack.c.h.b16 %v246
    %v411 = vunpack.c.l.b16 %v247
    %v412 = vunpack.c.h.b16 %v247
    %v413 = vunpack.c.l.b16 %v248
    %v414 = vunpack.c.h.b16 %v248
    %v415 = vunpack.c.l.b16 %v249
    %v416 = vunpack.c.h.b16 %v249
    %v417 = vunpack.c.l.b16 %v250
    %v418 = vunpack.c.h.b16 %v250
    %v419 = vunpack.c.l.b16 %v251
    %v420 = vunpack.c.h.b16 %v251
    %v421 = vunpack.c.l.b16 %v252
    %v422 = vunpack.c.h.b16 %v252
    %v423 = vunpack.c.l.b16 %v253
    %v424 = vunpack.c.h.b16 %v253
    %v425 = vunpack.c.l.b16 %v254
    %v426 = vunpack.c.h.b16 %v254
    %v427 = vunpack.c.l.b16 %v255
    %v428 = vunpack.c.h.b16 %v255
    %v429 = vunpack.c.l.b16 %v256
    %v430 = vunpack.c.h.b16 %v256
    %v431 = vunpack.c.l.b16 %v257
    %v432 = vunpack.c.h.b16 %v257
    %v433 = vunpack.c.l.b16 %v258
    %v434 = vunpack.c.h.b16 %v258
    %v435 = vunpack.c.l.b16 %v259
    %v436 = vunpack.c.h.b16 %v259
    %v437 = vunpack.c.l.b16 %v260
    %v438 = vunpack.c.h.b16 %v260
    %v439 = vunpack.c.l.b16 %v261
    %v440 = vunpack.c.h.b16 %v261
    %v441 = vunpack.c.l.b16 %v262
    %v442 = vunpack.c.h.b16 %v262
    %v443 = vunpack.c.l.b16 %v263
    %v444 = vunpack.c.h.b16 %v263
    %v445 = vunpack.c.l.b16 %v264
    %v446 = vunpack.c.h.b16 %v264
    %v447 = vunpack.c.l.b16 %v265
    %v448 = vunpack.c.h.b16 %v265
    %v449 = vunpack.c.l.b16 %v266
    %v450 = vunpack.c.h.b16 %v266
    %v451 = vunpack.c.l.b16 %v267
    %v452 = vunpack.c.h.b16 %v267
    %v453 = vunpack.c.l.b16 %v268
    %v454 = vunpack.c.h.b16 %v268
    %v455 = vunpack.c.l.b16 %v269
    %v456 = vunpack.c.h.b16 %v269
    %v457 = vunpack.c.l.b16 %v270
    %v458 = vunpack.c.h.b16 %v270
    %v459 = vunpack.c.l.b16 %v271
    %v460 = vunpack.c.h.b16 %v271
    %v461 = vunpack.c.l.b16 %v272
    %v462 = vunpack.c.h.b16 %v272
    %v463 = vunpack.c.l.b16 %v273
    %v464 = vunpack.c.h.b16 %v273
    %v465 = vunpack.c.l.b16 %v274
    %v466 = vunpack.c.h.b16 %v274
    %v467 = vunpack.c.l.b16 %v275
    %v468 = vunpack.c.h.b16 %v275
    %v469 = vunpack.c.l.b16 %v276
    %v470 = vunpack.c.h.b16 %v276
    %v471 = vunpack.c.l.b16 %v277
    %v472 = vunpack.c.h.b16 %v277
    %v473 = vunpack.c.l.b16 %v278
    %v474 = vunpack.c.h.b16 %v278
    %v475 = vunpack.c.l.b16 %v279
    %v476 = vunpack.c.h.b16 %v279
    %v477 = vunpack.c.l.b16 %v280
    %v478 = vunpack.c.h.b16 %v280
    %v479 = vpack.c.b16 %v353, %v351
    %v480 = vpack.c.b16 %v354, %v352
    %v481 = vpack.c.b16 %v357, %v355
    %v482 = vpack.c.b16 %v358, %v356
    %v483 = vpack.c.b16 %v361, %v359
    %v484 = vpack.c.b16 %v362, %v360
    %v485 = vpack.c.b16 %v365, %v363
    %v486 = vpack.c.b16 %v366, %v364
    %v487 = vpack.c.b16 %v369, %v367
    %v488 = vpack.c.b16 %v370, %v368
    %v489 = vpack.c.b16 %v373, %v371
    %v490 = vpack.c.b16 %v374, %v372
    %v491 = vpack.c.b16 %v377, %v375
    %v492 = vpack.c.b16 %v378, %v376
    %v493 = vpack.c.b16 %v381, %v379
    %v494 = vpack.c.b16 %v382, %v380
    %v495 = vpack.c.b16 %v385, %v383
    %v496 = vpack.c.b16 %v386, %v384
    %v497 = vpack.c.b16 %v389, %v387
    %v498 = vpack.c.b16 %v390, %v388
    %v499 = vpack.c.b16 %v393, %v391
    %v500 = vpack.c.b16 %v394, %v392
    %v501 = vpack.c.b16 %v397, %v395
    %v502 = vpack.c.b16 %v398, %v396
    %v503 = vpack.c.b16 %v401, %v399
    %v504 = vpack.c.b16 %v402, %v400
    %v505 = vpack.c.b16 %v405, %v403
    %v506 = vpack.c.b16 %v406, %v404
    %v507 = vpack.c.b16 %v409, %v407
    %v508 = vpack.c.b16 %v410, %v408
    %v509 = vpack.c.b16 %v413, %v411
    %v510 = vpack.c.b16 %v414, %v412
    %v511 = vpack.c.b16 %v417, %v415
    %v512 = vpack.c.b16 %v418, %v416
    %v513 = vpack.c.b16 %v421, %v419
    %v514 = vpack.c.b16 %v422, %v420
    %v515 = vpack.c.b16 %v425, %v423
    %v516 = vpack.c.b16 %v426, %v424
    %v517 = vpack.c.b16 %v429, %v427
    %v518 = vpack.c.b16 %v430, %v428
    %v519 = vpack.c.b16 %v433, %v431
    %v520 = vpack.c.b16 %v434, %v432
    %v521 = vpack.c.b16 %v437, %v435
    %v522 = vpack.c.b16 %v438, %v436
    %v523 = vpack.c.b16 %v441, %v439
    %v524 = vpack.c.b16 %v442, %v440
    %v525 = vpack.c.b16 %v445, %v443
    %v526 = vpack.c.b16 %v446, %v444
    %v527 = vpack.c.b16 %v449, %v447
    %v528 = vpack.c.b16 %v450, %v448
    %v529 = vpack.c.b16 %v453, %v451
    %v530 = vpack.c.b16 %v454, %v452
    %v531 = vpack.c.b16 %v457, %v455
    %v532 = vpack.c.b16 %v458, %v456
    %v533 = vpack.c.b16 %v461, %v459
    %v534 = vpack.c.b16 %v462, %v460
    %v535 = vpack.c.b16 %v465, %v463
    %v536 = vpack.c.b16 %v466, %v464
    %v537 = vpack.c.b16 %v469, %v467
    %v538 = vpack.c.b16 %v470, %v468
    %v539 = vpack.c.b16 %v473, %v471
    %v540 = vpack.c.b16 %v474, %v472
    %v541 = vpack.c.b16 %v477, %v475
    %v542 = vpack.c.b16 %v478, %v476
    %607 = vmatpush.bf16.msra.mxu0 %v493
    %608 = vmatpush.bf16.msra.mxu0 %v491
    %609 = vmatpush.bf16.msra.mxu0 %v489
    %610 = vmatpush.bf16.msra.mxu0 %v487
    %611 = vmatpush.bf16.msra.mxu0 %v485
    %612 = vmatpush.bf16.msra.mxu0 %v483
    %613 = vmatpush.bf16.msra.mxu0 %v481
    %614 = vmatpush.bf16.msra.mxu0 %v479
    %615 = vmatmul.bf16.gmra.mxu0 %v213
    %v616 = vpop.f32.mrf.mxu0
    %v617 = vadd.f32 %v283, %v616
    %v618 = vpop.f32.mrf.mxu0
    %v619 = vadd.f32 %v283, %v618
    %620 = vdwg.mxu0
    %621 = vmatpush.bf16.msra.mxu0 %v509
    %622 = vmatpush.bf16.msra.mxu0 %v507
    %623 = vmatpush.bf16.msra.mxu0 %v505
    %624 = vmatpush.bf16.msra.mxu0 %v503
    %625 = vmatpush.bf16.msra.mxu0 %v501
    %626 = vmatpush.bf16.msra.mxu0 %v499
    %627 = vmatpush.bf16.msra.mxu0 %v497
    %628 = vmatpush.bf16.msra.mxu0 %v495
    %629 = vmatmul.bf16.gmra.mxu0 %v214
    %v630 = vpop.f32.mrf.mxu0
    %v631 = vadd.f32 %v617, %v630
    %v632 = vpop.f32.mrf.mxu0
    %v633 = vadd.f32 %v619, %v632
    %634 = vdwg.mxu0
    %635 = vmatpush.bf16.msra.mxu0 %v525
    %636 = vmatpush.bf16.msra.mxu0 %v523
    %637 = vmatpush.bf16.msra.mxu0 %v521
    %638 = vmatpush.bf16.msra.mxu0 %v519
    %639 = vmatpush.bf16.msra.mxu0 %v517
    %640 = vmatpush.bf16.msra.mxu0 %v515
    %641 = vmatpush.bf16.msra.mxu0 %v513
    %642 = vmatpush.bf16.msra.mxu0 %v511
    %643 = vmatmul.bf16.gmra.mxu0 %v215
    %v644 = vpop.f32.mrf.mxu0
    %v645 = vadd.f32 %v631, %v644
    %v646 = vpop.f32.mrf.mxu0
    %v647 = vadd.f32 %v633, %v646
    %648 = vdwg.mxu0
    %649 = vmatpush.bf16.msra.mxu0 %v541
    %650 = vmatpush.bf16.msra.mxu0 %v539
    %651 = vmatpush.bf16.msra.mxu0 %v537
    %652 = vmatpush.bf16.msra.mxu0 %v535
    %653 = vmatpush.bf16.msra.mxu0 %v533
    %654 = vmatpush.bf16.msra.mxu0 %v531
    %655 = vmatpush.bf16.msra.mxu0 %v529
    %656 = vmatpush.bf16.msra.mxu0 %v527
    %657 = vmatmul.bf16.gmra.mxu0 %v216
    %v658 = vpop.f32.mrf.mxu0
    %v659 = vadd.f32 %v645, %v658
    %v660 = vpop.f32.mrf.mxu0
    %v661 = vadd.f32 %v647, %v660
    %662 = vdwg.mxu0
    %663 = vmatpush.bf16.msra.mxu0 %v494
    %664 = vmatpush.bf16.msra.mxu0 %v492
    %665 = vmatpush.bf16.msra.mxu0 %v490
    %666 = vmatpush.bf16.msra.mxu0 %v488
    %667 = vmatpush.bf16.msra.mxu0 %v486
    %668 = vmatpush.bf16.msra.mxu0 %v484
    %669 = vmatpush.bf16.msra.mxu0 %v482
    %670 = vmatpush.bf16.msra.mxu0 %v480
    %671 = vmatmul.bf16.gmra.mxu0 %v213
    %v672 = vpop.f32.mrf.mxu0
    %v673 = vadd.f32 %v284, %v672
    %v674 = vpop.f32.mrf.mxu0
    %v675 = vadd.f32 %v284, %v674
    %676 = vdwg.mxu0
    %677 = vmatpush.bf16.msra.mxu0 %v510
    %678 = vmatpush.bf16.msra.mxu0 %v508
    %679 = vmatpush.bf16.msra.mxu0 %v506
    %680 = vmatpush.bf16.msra.mxu0 %v504
    %681 = vmatpush.bf16.msra.mxu0 %v502
    %682 = vmatpush.bf16.msra.mxu0 %v500
    %683 = vmatpush.bf16.msra.mxu0 %v498
    %684 = vmatpush.bf16.msra.mxu0 %v496
    %685 = vmatmul.bf16.gmra.mxu0 %v214
    %v686 = vpop.f32.mrf.mxu0
    %v687 = vadd.f32 %v673, %v686
    %v688 = vpop.f32.mrf.mxu0
    %v689 = vadd.f32 %v675, %v688
    %690 = vdwg.mxu0
    %691 = vmatpush.bf16.msra.mxu0 %v526
    %692 = vmatpush.bf16.msra.mxu0 %v524
    %693 = vmatpush.bf16.msra.mxu0 %v522
    %694 = vmatpush.bf16.msra.mxu0 %v520
    %695 = vmatpush.bf16.msra.mxu0 %v518
    %696 = vmatpush.bf16.msra.mxu0 %v516
    %697 = vmatpush.bf16.msra.mxu0 %v514
    %698 = vmatpush.bf16.msra.mxu0 %v512
    %699 = vmatmul.bf16.gmra.mxu0 %v215
    %v700 = vpop.f32.mrf.mxu0
    %v701 = vadd.f32 %v687, %v700
    %v702 = vpop.f32.mrf.mxu0
    %v703 = vadd.f32 %v689, %v702
    %704 = vdwg.mxu0
    %705 = vmatpush.bf16.msra.mxu0 %v542
    %706 = vmatpush.bf16.msra.mxu0 %v540
    %707 = vmatpush.bf16.msra.mxu0 %v538
    %708 = vmatpush.bf16.msra.mxu0 %v536
    %709 = vmatpush.bf16.msra.mxu0 %v534
    %710 = vmatpush.bf16.msra.mxu0 %v532
    %711 = vmatpush.bf16.msra.mxu0 %v530
    %712 = vmatpush.bf16.msra.mxu0 %v528
    %713 = vmatmul.bf16.gmra.mxu0 %v216
    %v714 = vpop.f32.mrf.mxu0
    %v715 = vadd.f32 %v701, %v714
    %v716 = vpop.f32.mrf.mxu0
    %v717 = vadd.f32 %v703, %v716
    %718 = vdwg.mxu0
    %v719 = vmax.f32 %v659, 0.0
    %v720 = vmax.f32 %v715, 0.0
    %v721 = vmax.f32 %v661, 0.0
    %v722 = vmax.f32 %v717, 0.0
    %v723 = vpack.c.bf16 %v721, %v719
    %v724 = vpack.c.bf16 %v722, %v720
    %v725 = vld [vmem:[#allocation10] sm:$0xf]
    %v726 = vld [vmem:[#allocation10 + $0x4] sm:$0xf]
    %v727 = vld [vmem:[#allocation10 + $0x8] sm:$0xf]
    %v728 = vld [vmem:[#allocation10 + $0xc] sm:$0xf]
    %v729 = vld [vmem:[#allocation10 + $0x10] sm:$0xf]
    %v730 = vld [vmem:[#allocation10 + $0x14] sm:$0xf]
    %v731 = vld [vmem:[#allocation10 + $0x18] sm:$0xf]
    %v732 = vld [vmem:[#allocation10 + $0x1c] sm:$0xf]
    %v733 = vld [vmem:[#allocation10 + $0x20] sm:$0xf]
    %v734 = vld [vmem:[#allocation10 + $0x24] sm:$0xf]
    %v735 = vld [vmem:[#allocation10 + $0x28] sm:$0xf]
    %v736 = vld [vmem:[#allocation10 + $0x2c] sm:$0xf]
    %v737 = vld [vmem:[#allocation10 + $0x30] sm:$0xf]
    %v738 = vld [vmem:[#allocation10 + $0x34] sm:$0xf]
    %v739 = vld [vmem:[#allocation10 + $0x38] sm:$0xf]
    %v740 = vld [vmem:[#allocation10 + $0x3c] sm:$0xf]
    %v741 = vld [vmem:[#allocation10 + $0x40] sm:$0xf]
    %v742 = vld [vmem:[#allocation10 + $0x44] sm:$0xf]
    %v743 = vld [vmem:[#allocation10 + $0x48] sm:$0xf]
    %v744 = vld [vmem:[#allocation10 + $0x4c] sm:$0xf]
    %v745 = vld [vmem:[#allocation10 + $0x50] sm:$0xf]
    %v746 = vld [vmem:[#allocation10 + $0x54] sm:$0xf]
    %v747 = vld [vmem:[#allocation10 + $0x58] sm:$0xf]
    %v748 = vld [vmem:[#allocation10 + $0x5c] sm:$0xf]
    %v749 = vld [vmem:[#allocation10 + $0x60] sm:$0xf]
    %v750 = vld [vmem:[#allocation10 + $0x64] sm:$0xf]
    %v751 = vld [vmem:[#allocation10 + $0x68] sm:$0xf]
    %v752 = vld [vmem:[#allocation10 + $0x6c] sm:$0xf]
    %v753 = vld [vmem:[#allocation10 + $0x70] sm:$0xf]
    %v754 = vld [vmem:[#allocation10 + $0x74] sm:$0xf]
    %v755 = vld [vmem:[#allocation10 + $0x78] sm:$0xf]
    %v756 = vld [vmem:[#allocation10 + $0x7c] sm:$0xf]
    %v757 = vld [vmem:[%s6] sm:$0x1]
    %v759 = vperm.slane %v757, 0
    %v793 = vunpack.c.l.b16 %v725
    %v794 = vunpack.c.l.b16 %v726
    %v795 = vunpack.c.l.b16 %v727
    %v796 = vunpack.c.l.b16 %v728
    %v797 = vunpack.c.l.b16 %v729
    %v798 = vunpack.c.l.b16 %v730
    %v799 = vunpack.c.l.b16 %v731
    %v800 = vunpack.c.l.b16 %v732
    %v801 = vunpack.c.l.b16 %v733
    %v802 = vunpack.c.l.b16 %v734
    %v803 = vunpack.c.l.b16 %v735
    %v804 = vunpack.c.l.b16 %v736
    %v805 = vunpack.c.l.b16 %v737
    %v806 = vunpack.c.l.b16 %v738
    %v807 = vunpack.c.l.b16 %v739
    %v808 = vunpack.c.l.b16 %v740
    %v809 = vunpack.c.l.b16 %v741
    %v810 = vunpack.c.l.b16 %v742
    %v811 = vunpack.c.l.b16 %v743
    %v812 = vunpack.c.l.b16 %v744
    %v813 = vunpack.c.l.b16 %v745
    %v814 = vunpack.c.l.b16 %v746
    %v815 = vunpack.c.l.b16 %v747
    %v816 = vunpack.c.l.b16 %v748
    %v817 = vunpack.c.l.b16 %v749
    %v818 = vunpack.c.l.b16 %v750
    %v819 = vunpack.c.l.b16 %v751
    %v820 = vunpack.c.l.b16 %v752
    %v821 = vunpack.c.l.b16 %v753
    %v822 = vunpack.c.l.b16 %v754
    %v823 = vunpack.c.l.b16 %v755
    %v824 = vunpack.c.l.b16 %v756
    %v825 = vpack.c.b16 %v794, %v793
    %v826 = vpack.c.b16 %v796, %v795
    %v827 = vpack.c.b16 %v798, %v797
    %v828 = vpack.c.b16 %v800, %v799
    %v829 = vpack.c.b16 %v802, %v801
    %v830 = vpack.c.b16 %v804, %v803
    %v831 = vpack.c.b16 %v806, %v805
    %v832 = vpack.c.b16 %v808, %v807
    %v833 = vpack.c.b16 %v810, %v809
    %v834 = vpack.c.b16 %v812, %v811
    %v835 = vpack.c.b16 %v814, %v813
    %v836 = vpack.c.b16 %v816, %v815
    %v837 = vpack.c.b16 %v818, %v817
    %v838 = vpack.c.b16 %v820, %v819
    %v839 = vpack.c.b16 %v822, %v821
    %v840 = vpack.c.b16 %v824, %v823
    %857 = vmatpush.bf16.msra.mxu0 %v832
    %858 = vmatpush.bf16.msra.mxu0 %v831
    %859 = vmatpush.bf16.msra.mxu0 %v830
    %860 = vmatpush.bf16.msra.mxu0 %v829
    %861 = vmatpush.bf16.msra.mxu0 %v828
    %862 = vmatpush.bf16.msra.mxu0 %v827
    %863 = vmatpush.bf16.msra.mxu0 %v826
    %864 = vmatpush.bf16.msra.mxu0 %v825
    %865 = vmatmul.bf16.gmra.mxu0 %v723
    %v866 = vpop.f32.mrf.mxu0
    %v867 = vadd.f32 %v759, %v866
    %v868 = vpop.f32.mrf.mxu0
    %v869 = vadd.f32 %v759, %v868
    %870 = vdwg.mxu0
    %871 = vmatpush.bf16.msra.mxu0 %v840
    %872 = vmatpush.bf16.msra.mxu0 %v839
    %873 = vmatpush.bf16.msra.mxu0 %v838
    %874 = vmatpush.bf16.msra.mxu0 %v837
    %875 = vmatpush.bf16.msra.mxu0 %v836
    %876 = vmatpush.bf16.msra.mxu0 %v835
    %877 = vmatpush.bf16.msra.mxu0 %v834
    %878 = vmatpush.bf16.msra.mxu0 %v833
    %879 = vmatmul.bf16.gmra.mxu0 %v724
    %v880 = vpop.f32.mrf.mxu0
    %v881 = vadd.f32 %v867, %v880
    %v882 = vpop.f32.mrf.mxu0
    %v883 = vadd.f32 %v869, %v882
    %884 = vdwg.mxu0
    %885 = vst [vmem:[#allocation11] sm:$0xff] %v881
    %886 = vst [vmem:[#allocation11 + $0x8] sm:$0xff] %v883
    // Predicated region
    $region50: #{tpu_custom_call.1} parent=1 // pred_check
      _
    $region51: #{tpu_custom_call.1} parent=1 // pred_check_branch
      %888 = sbr.rel (0) target = $region53
    $region52: #{tpu_custom_call.1} parent=1 // pred_region
      %890 = vsyncadd [#allocation4], 0
      %s891 = sshll.u32 [#allocation11], 4
      %s892 = int_to_ptr.vmem [resolvable:$true] %s891
      %s893 = sshll.u32 %s7, 4
      %s894 = int_to_ptr.hbm [resolvable:$true] %s893
      %899 = dma.vmem_to_hbm [thread:$0]  %s892, 256, %s894, [#allocation4], 128, 128, 8
    $region53: #{tpu_custom_call.1} parent=1 // pred_fallthru
      _
    // Predicated region
    $region54: #{tpu_custom_call.1} parent=1 // pred_check
      _
    $region55: #{tpu_custom_call.1} parent=1 // pred_check_branch
      %901 = sbr.rel (0) target = $region57
    $region56: #{tpu_custom_call.1} parent=1 // pred_region
      %903 = dma.done [#allocation4], 256
    $region57: #{tpu_custom_call.1} parent=1 // pred_fallthru
      _
    %904 = vsyncpa [#allocation3], 1
    %905 = vsyncpa [#allocation6], 1
    %906 = vsyncpa [#allocation9], 1
    %907 = vsyncpa [#allocation4], 1

</llo_original>
